<compile_context>
chip_gen: v7x
topology: tpu7x:2x2x1
jax: 0.10.0
libtpu: 0.0.40
codegen_flags: <defaults>
</compile_context>

<pallas_src>
import functools

import jax
import jax.numpy as jnp
from jax.experimental import pallas as pl
from jax.experimental.pallas import tpu as pltpu

DEFAULT_EPSILON = 2e-20

_LANES = 128        # vreg lane width
_SUBLANES = 8       # vreg sublane depth
# 8192 rows x 128 lanes x 4 B = 4 MiB per (f32) input buffer -> 8 MiB double-buffered.
_MAX_BLOCK_ROWS = 8192


def _entropy_block_kernel(p_ref, out_ref, *, epsilon: float, log_input: bool):
    """Fold a (block_rows, 128) tile of p*log(p+eps) (or exp(p)*p if log_input)
    into an (8, 128) partial sum using only VPU/EUP work."""
    p = p_ref[...].astype(jnp.float32)                      # (block_rows, 128)
    if log_input:
        term = jnp.exp(p) * p
    else:
        term = p * jnp.log(p + jnp.float32(epsilon))
    # (block_rows, 128) -> (block_rows//8, 8, 128); reducing the leading axis is a
    # chain of vreg-wide elementwise adds (no XLU cross-lane work in steady state).
    out_ref[...] = term.reshape(-1, _SUBLANES, _LANES).sum(axis=0)


def _round_up(x: int, m: int) -> int:
    return ((x + m - 1) // m) * m


@functools.partial(jax.jit, static_argnames=("epsilon", "base", "log_input"))
def entropy_mean(probabilities: jax.Array,
                 *,
                 epsilon: float = DEFAULT_EPSILON,
                 base=None,
                 log_input: bool = False) -> jax.Array:
    """Entropy with reduction='mean' over per-row entropies (classes on the last axis)."""
    n_class = probabilities.shape[-1]
    n_batch_rows = probabilities.size // n_class        # number of per-row entropies

    # Flatten to a lane-dense (rows, 128) layout; zero padding contributes 0 to the sum.
    flat = probabilities.reshape(-1)
    total = flat.shape[0]
    n_rows = pl.cdiv(total, _LANES)
    block_rows = min(_MAX_BLOCK_ROWS, _round_up(max(n_rows, _SUBLANES), _SUBLANES))
    num_blocks = pl.cdiv(n_rows, block_rows)
    padded_rows = num_blocks * block_rows
    pad = padded_rows * _LANES - total
    if pad:
        flat = jnp.concatenate([flat, jnp.zeros((pad,), flat.dtype)])
    p2d = flat.reshape(padded_rows, _LANES)

    kernel = functools.partial(_entropy_block_kernel,
                               epsilon=float(epsilon), log_input=bool(log_input))

    out_rows = num_blocks * _SUBLANES
    partials = pl.pallas_call(
        kernel,
        out_shape=jax.ShapeDtypeStruct((out_rows, _LANES), jnp.float32),
        grid_spec=pltpu.PrefetchScalarGridSpec(
            num_scalar_prefetch=0,
            grid=(num_blocks,),
            in_specs=[pl.BlockSpec((block_rows, _LANES), lambda i: (i, 0))],
            out_specs=pl.BlockSpec((_SUBLANES, _LANES), lambda i: (i, 0)),
        ),
        compiler_params=pltpu.CompilerParams(
            dimension_semantics=("parallel",),          # independent blocks; dual-TC on v7x
            vmem_limit_bytes=32 * 1024 * 1024,
        ),
        cost_estimate=pl.CostEstimate(
            flops=3 * padded_rows * _LANES,
            transcendentals=padded_rows * _LANES,
            bytes_accessed=p2d.dtype.itemsize * padded_rows * _LANES + 4 * out_rows * _LANES,
        ),
    )(p2d)

    ent_sum = -jnp.sum(partials)                        # sum of all per-row entropies
    if (base is not None) and (not log_input):
        ent_sum = ent_sum / jnp.log(jnp.float32(base))  # log base-b = ln / ln(b)
    return ent_sum / jnp.float32(n_batch_rows)          # reduction='mean'


if __name__ == "__main__":
    key = jax.random.PRNGKey(0)
    B, N = 16, 32
    logits = jax.random.normal(key, (B, N), dtype=jnp.float32)
    probs = jax.nn.softmax(logits, axis=-1)             # valid probability distributions

    result = entropy_mean(probs)
    result = jax.block_until_ready(result)

    # Pure-JAX reference (mirrors the PyTorch forward with default args).
    ref_ent = -jnp.sum(probs * jnp.log(probs + DEFAULT_EPSILON), axis=-1)
    ref = jnp.mean(ref_ent)

    assert jnp.allclose(result, ref, rtol=1e-5, atol=1e-6), (result, ref)
    print("KERNEL_OK")
</pallas_src>

<mosaic_0001>
module attributes {stable_mosaic.version = 11 : i64} {
  func.func @_entropy_block_kernel(%arg0: i32, %arg1: memref<8x128xf32, #tpu.memory_space<vmem>>, %arg2: memref<8x128xf32, #tpu.memory_space<vmem>>) attributes {dimension_semantics = [#tpu.dimension_semantics<parallel>], iteration_bounds = array<i64: 1>, scalar_prefetch = 0 : i64, scratch_operands = 0 : i64, tpu.core_type = #tpu.core_type<tc>, window_params = [{transform_indices = @transform_0, window_bounds = array<i64: 8, 128>}, {transform_indices = @transform_1, window_bounds = array<i64: 8, 128>}]} {
    %c0 = arith.constant 0 : index
    %c0_0 = arith.constant 0 : index
    %0 = vector.load %arg1[%c0, %c0_0] : memref<8x128xf32, #tpu.memory_space<vmem>>, vector<8x128xf32>
    %cst = arith.constant 2.000000e-20 : f32
    %1 = vector.broadcast %cst : f32 to vector<8x128xf32>
    %2 = arith.addf %0, %1 : vector<8x128xf32>
    %3 = math.log %2 : vector<8x128xf32>
    %4 = arith.mulf %0, %3 : vector<8x128xf32>
    %5 = vector.shape_cast %4 : vector<8x128xf32> to vector<1x8x128xf32>
    %cst_1 = arith.constant dense<0.000000e+00> : vector<8x128xf32>
    %6 = vector.multi_reduction <add>, %5, %cst_1 [0] : vector<1x8x128xf32> to vector<8x128xf32>
    %c0_2 = arith.constant 0 : index
    %c0_3 = arith.constant 0 : index
    %7 = vector.load %arg2[%c0_2, %c0_3] : memref<8x128xf32, #tpu.memory_space<vmem>>, vector<8x128xf32>
    tpu.vector_store %arg2[%c0_2, %c0_3], %6 {strides = array<i32>} : memref<8x128xf32, #tpu.memory_space<vmem>>, vector<8x128xf32>,
    return
  }
  func.func @transform_0(%arg0: i32) -> (i32, i32) {
    %c0_i32 = arith.constant 0 : i32
    %c0_i32_0 = arith.constant 0 : i32
    return %arg0, %c0_i32 : i32, i32
  }
  func.func @transform_1(%arg0: i32) -> (i32, i32) {
    %c0_i32 = arith.constant 0 : i32
    %c0_i32_0 = arith.constant 0 : i32
    return %arg0, %c0_i32 : i32, i32
  }
}

</mosaic_0001>

<llo_original>
// kernel: entropy_mean.1
$region0: #{entropy_mean.1}
  #allocation0 [shape = 'u32[]', space=smem, size = 0x4, offset = 0x4, fixed_abs, tag = 'smem constant byte address 0x4 - core index']
  #allocation1 [shape = 'u32[144,128]{1,0:T(1,128)}', space=vmem, size = 0x12000, scoped, tag = 'internal scratch']
  %s0 = inlined_call_operand.vmem [shape: f32[8,128], index: 0, kind: input, shape index: {}]
  %s1 = inlined_call_operand.vmem [shape: f32[8,128], index: 1, kind: output, shape index: {}]
  %s2 = sld [smem:[#allocation0]]
  $region14: #{entropy_mean.1} parent=0
    _
  %s4 = ssub.s32 1, %s2
  %s5 = scalar_select 0, %s4, %s2
  // Predicated region
  $region2: #{entropy_mean.1} parent=0 // pred_check
    _
  $region3: #{entropy_mean.1} parent=0 // pred_check_branch
    %7 = sbr.rel (0) target = $region5
  $region4: #{entropy_mean.1} parent=0 // pred_region
    _
  $region5: #{entropy_mean.1} parent=0 // pred_fallthru
    _
  %v8 = vld [vmem:[%s0] sm:$0xff]
  %v9 = vadd.f32 %v8, 2e-20
  %v10 = vlog2.pop %v9
  %v11 = vmul.f32 %v10, 0.6931472
  %v12 = vmul.f32 %v8, %v11
  %v13 = vadd.f32 %v12, 0.0
  %14 = vst [vmem:[%s1] sm:$0xff] %v13
  // Predicated region
  $region6: #{entropy_mean.1} parent=0 // pred_check
    _
  $region7: #{entropy_mean.1} parent=0 // pred_check_branch
    %16 = sbr.rel (0) target = $region9
  $region8: #{entropy_mean.1} parent=0 // pred_region
    _
  $region9: #{entropy_mean.1} parent=0 // pred_fallthru
    _
  // Predicated region
  $region10: #{entropy_mean.1} parent=0 // pred_check
    _
  $region11: #{entropy_mean.1} parent=0 // pred_check_branch
    %18 = sbr.rel (0) target = $region13
  $region12: #{entropy_mean.1} parent=0 // pred_region
    _
  $region13: #{entropy_mean.1} parent=0 // pred_fallthru
    _

</llo_original>
